<compile_context>
chip_gen: v7x
topology: tpu7x:2x2x1
jax: 0.10.0
libtpu: 0.0.40
codegen_flags: <defaults>
</compile_context>

<pallas_src>
import functools
import math

import jax
import jax.numpy as jnp
import numpy as np
from jax import lax
from jax.experimental import pallas as pl
from jax.experimental.pallas import tpu as pltpu

_VMEM_LIMIT = 48 * 1024 * 1024   # explicit scoped-VMEM limit; safe on v5e/v6e/v7x


def _pick_tile(n, cap):
    """Largest tile t <= cap with n % t == 0 and (t % 8 == 0 or t == n)."""
    if n <= cap:
        return n
    for t in range(cap, 7, -1):
        if n % t == 0 and t % 8 == 0:
            return t
    return n


# ---------------------------------------------------------------------------
# Kernel 1a: tiled GroupNorm(32, C) statistics.
# One grid step = one (batch, L-tile); L-axis is a VMEM-scratch reduction.
# ---------------------------------------------------------------------------
def _gn_stats_kernel(x_ref, g_ref, mean_out, inv_out, s_sc, ss_sc, *, eps):
    li = pl.program_id(1)

    @pl.when(li == 0)
    def _():
        s_sc[...] = jnp.zeros_like(s_sc)
        ss_sc[...] = jnp.zeros_like(ss_sc)

    x = x_ref[0].astype(jnp.float32)                           # (TL, C)
    s_sc[...] += jnp.sum(x, axis=0, keepdims=True)             # (1, C)
    ss_sc[...] += jnp.sum(x * x, axis=0, keepdims=True)        # (1, C)

    @pl.when(li == pl.num_programs(1) - 1)
    def _():
        # Group statistics via a (C, C) group-averaging matmul (C stays lane-dense).
        mean = jnp.dot(s_sc[...], g_ref[...], preferred_element_type=jnp.float32)
        mean_sq = jnp.dot(ss_sc[...], g_ref[...], preferred_element_type=jnp.float32)
        # TODO(synk): E[x^2]-E[x]^2 can cancel for huge-offset inputs; a centered
        # second pass would be safer but costs another full read of x.
        var = mean_sq - mean * mean
        mean_out[0] = mean
        inv_out[0] = lax.rsqrt(var + eps)


# ---------------------------------------------------------------------------
# Kernel 1b: normalize + fused q/k/v projection (single (C, 3C) bf16 matmul).
# One grid step = one (batch, L-tile).
# ---------------------------------------------------------------------------
def _norm_qkv_kernel(x_ref, mean_ref, inv_ref, gamma_ref, beta_ref,
                     w_ref, b_ref, q_out, k_out, v_out):
    C = q_out.shape[-1]
    x = x_ref[0].astype(jnp.float32)                           # (TL, C)
    h = (x - mean_ref[0]) * inv_ref[0] * gamma_ref[...] + beta_ref[...]
    # One fused (TL, C) @ (C, 3C) MXU matmul (bf16 operands, f32 accumulation).
    qkv = jnp.dot(h.astype(w_ref.dtype), w_ref[...],
                  preferred_element_type=jnp.float32) + b_ref[...]
    q_out[0] = qkv[:, :C].astype(q_out.dtype)
    k_out[0] = qkv[:, C:2 * C].astype(k_out.dtype)
    v_out[0] = qkv[:, 2 * C:].astype(v_out.dtype)


# ---------------------------------------------------------------------------
# Kernel 2: flash-style attention (online softmax over key tiles) + proj_out
# + residual.  One grid step = one (batch, query-tile, key-tile).
# ---------------------------------------------------------------------------
def _attn_proj_kernel(q_ref, k_ref, v_ref, x_ref, wp_ref, bp_ref, o_ref,
                      m_sc, l_sc, acc_sc):
    ki = pl.program_id(2)

    @pl.when(ki == 0)
    def _():
        m_sc[...] = jnp.full_like(m_sc, -jnp.inf)
        l_sc[...] = jnp.zeros_like(l_sc)
        acc_sc[...] = jnp.zeros_like(acc_sc)

    q = q_ref[0]                                               # (TQ, C) bf16, pre-scaled
    k = k_ref[0]                                               # (TK, C) bf16
    # logits[i, j] = sum_c q[i, c] * k[j, c]  -> contract over lanes on the MXU
    s = lax.dot_general(q, k, (((1,), (1,)), ((), ())),
                        preferred_element_type=jnp.float32)    # (TQ, TK) f32

    m_prev = m_sc[...]
    m_new = jnp.maximum(m_prev, jnp.max(s, axis=-1, keepdims=True))
    alpha = jnp.exp(m_prev - m_new)
    p = jnp.exp(s - m_new)                                     # f32 (TQ, TK)
    l_sc[...] = alpha * l_sc[...] + jnp.sum(p, axis=-1, keepdims=True)
    acc_sc[...] = alpha * acc_sc[...] + jnp.dot(
        p.astype(v_ref.dtype), v_ref[0], preferred_element_type=jnp.float32)
    m_sc[...] = m_new

    @pl.when(ki == pl.num_programs(2) - 1)
    def _():
        # Normalize after the PV matmul: one (TQ, C) multiply with an EUP approx
        # reciprocal instead of a (TQ, L) VPU divide.
        o = acc_sc[...] * pl.reciprocal(l_sc[...], approx=True)
        h = jnp.dot(o.astype(wp_ref.dtype), wp_ref[...],
                    preferred_element_type=jnp.float32) + bp_ref[...]
        o_ref[0] = (x_ref[0].astype(jnp.float32) + h).astype(o_ref.dtype)


def attn_block(x_ncl, gamma, beta, wq, bq, wk, bk, wv, bv, wp, bp,
               *, num_groups=32, eps=1e-6):
    """AttnBlock forward.  x_ncl: (B, C, L);  conv weights in torch (C, C, 1) layout."""
    B, C, L = x_ncl.shape
    assert C % num_groups == 0, "GroupNorm(32, C) requires C % 32 == 0"
    gsize = C // num_groups
    scale = float(C) ** (-0.5)
    mxu_dtype = jnp.bfloat16

    # Channels-last working layout, kept in the input's native dtype.
    x_blc = jnp.transpose(x_ncl, (0, 2, 1))                    # (B, L, C)

    # 1x1 conv weights -> (Cin, Cout); fold 1/sqrt(C) into Wq/bq; fuse q/k/v
    # weights into a single (C, 3C) bf16 matrix (one MXU RHS push per tile).
    def to_mat(w):
        return jnp.transpose(w[:, :, 0]).astype(jnp.float32)

    w_qkv = jnp.concatenate([to_mat(wq) * scale, to_mat(wk), to_mat(wv)],
                            axis=1).astype(mxu_dtype)          # (C, 3C)
    b_qkv = jnp.concatenate([bq * scale, bk, bv]).reshape(1, 3 * C).astype(jnp.float32)
    wp_m = to_mat(wp).astype(mxu_dtype)                        # (C, C)
    bp_m = bp.reshape(1, C).astype(jnp.float32)
    gamma_m = gamma.reshape(1, C).astype(jnp.float32)
    beta_m = beta.reshape(1, C).astype(jnp.float32)

    # Group-averaging matrix: G[i, j] = 1/(L*gsize) if channels i, j share a group.
    gid = jnp.arange(C) // gsize
    G = (gid[:, None] == gid[None, :]).astype(jnp.float32) / float(L * gsize)

    # ---- kernel 1a: tiled GroupNorm statistics ---------------------------------
    TL = _pick_tile(L, 512)
    nl = L // TL
    x_tile_spec = pl.BlockSpec((1, TL, C), lambda b, l: (b, l, 0))
    stat_spec = pl.BlockSpec((1, 1, C), lambda b, l: (b, 0, 0))

    mean, inv = pl.pallas_call(
        functools.partial(_gn_stats_kernel, eps=float(eps)),
        out_shape=(jax.ShapeDtypeStruct((B, 1, C), jnp.float32),
                   jax.ShapeDtypeStruct((B, 1, C), jnp.float32)),
        grid=(B, nl),
        in_specs=[x_tile_spec, pl.BlockSpec((C, C), lambda b, l: (0, 0))],
        out_specs=(stat_spec, stat_spec),
        scratch_shapes=[pltpu.VMEM((1, C), jnp.float32),
                        pltpu.VMEM((1, C), jnp.float32)],
        compiler_params=pltpu.CompilerParams(
            dimension_semantics=("parallel", "arbitrary"),
            vmem_limit_bytes=_VMEM_LIMIT),
    )(x_blc, G)

    # ---- kernel 1b: normalize + fused q/k/v projection, tiled over L -----------
    vec_c_spec = pl.BlockSpec((1, C), lambda b, l: (0, 0))
    qkv_shape = jax.ShapeDtypeStruct((B, L, C), mxu_dtype)
    qkv_out_spec = pl.BlockSpec((1, TL, C), lambda b, l: (b, l, 0))

    q, k, v = pl.pallas_call(
        _norm_qkv_kernel,
        out_shape=(qkv_shape, qkv_shape, qkv_shape),
        grid=(B, nl),
        in_specs=[x_tile_spec, stat_spec, stat_spec, vec_c_spec, vec_c_spec,
                  pl.BlockSpec((C, 3 * C), lambda b, l: (0, 0)),
                  pl.BlockSpec((1, 3 * C), lambda b, l: (0, 0))],
        out_specs=(qkv_out_spec, qkv_out_spec, qkv_out_spec),
        compiler_params=pltpu.CompilerParams(
            dimension_semantics=("parallel", "parallel"),
            vmem_limit_bytes=_VMEM_LIMIT),
    )(x_blc, mean, inv, gamma_m, beta_m, w_qkv, b_qkv)

    # ---- kernel 2: flash-style attention + proj_out + residual -----------------
    TQ = _pick_tile(L, 256)
    TK = _pick_tile(L, 512)
    nq, nk = L // TQ, L // TK

    q_spec = pl.BlockSpec((1, TQ, C), lambda b, qi, ki: (b, qi, 0))
    kv_spec = pl.BlockSpec((1, TK, C), lambda b, qi, ki: (b, ki, 0))
    x_spec = pl.BlockSpec((1, TQ, C), lambda b, qi, ki: (b, qi, 0))
    wp_spec = pl.BlockSpec((C, C), lambda b, qi, ki: (0, 0))
    bp_spec = pl.BlockSpec((1, C), lambda b, qi, ki: (0, 0))

    itemsize = jnp.dtype(x_ncl.dtype).itemsize
    flops = int(B) * (4 * L * L * C + 2 * L * C * C)
    bytes_accessed = (B * L * C * 2                 # q (bf16)
                      + B * nq * 2 * L * C * 2      # k, v re-read per query tile (bf16)
                      + 2 * B * L * C * itemsize    # residual read + output write
                      + 2 * C * C + 4 * C)          # proj weight + bias

    out_blc = pl.pallas_call(
        _attn_proj_kernel,
        out_shape=jax.ShapeDtypeStruct((B, L, C), x_ncl.dtype),
        grid=(B, nq, nk),
        in_specs=[q_spec, kv_spec, kv_spec, x_spec, wp_spec, bp_spec],
        out_specs=x_spec,
        scratch_shapes=[pltpu.VMEM((TQ, 1), jnp.float32),
                        pltpu.VMEM((TQ, 1), jnp.float32),
                        pltpu.VMEM((TQ, C), jnp.float32)],
        compiler_params=pltpu.CompilerParams(
            dimension_semantics=("parallel", "parallel", "arbitrary"),
            vmem_limit_bytes=_VMEM_LIMIT),
        cost_estimate=pl.CostEstimate(flops=flops,
                                      transcendentals=int(B) * L * L,
                                      bytes_accessed=int(bytes_accessed)),
    )(q, k, v, x_blc, wp_m, bp_m)

    return jnp.transpose(out_blc, (0, 2, 1)).astype(x_ncl.dtype)   # back to NCL


# ---------------------------------------------------------------------------
# Pure-JAX f32 reference of the PyTorch AttnBlock forward (correctness check).
# ---------------------------------------------------------------------------
def _attn_block_ref(x, gamma, beta, wq, bq, wk, bk, wv, bv, wp, bp,
                    num_groups=32, eps=1e-6):
    B, C, L = x.shape
    g = C // num_groups
    xg = x.reshape(B, num_groups, g * L)
    mean = xg.mean(axis=-1, keepdims=True)
    var = xg.var(axis=-1, keepdims=True)
    h = ((xg - mean) / jnp.sqrt(var + eps)).reshape(B, C, L)
    h = h * gamma[None, :, None] + beta[None, :, None]

    def conv1x1(t, w, b):
        return jnp.einsum('oc,bcl->bol', w[:, :, 0], t) + b[None, :, None]

    q = conv1x1(h, wq, bq)
    k = conv1x1(h, wk, bk)
    v = conv1x1(h, wv, bv)
    qT = jnp.transpose(q, (0, 2, 1))                               # (B, L, C)
    w_ = jnp.einsum('bic,bcj->bij', qT, k) * (float(C) ** (-0.5))
    w_ = jax.nn.softmax(w_, axis=2)
    wT = jnp.transpose(w_, (0, 2, 1))                              # (B, j, i)
    h2 = jnp.einsum('bcj,bji->bci', v, wT)
    h2 = conv1x1(h2, wp, bp)
    return x + h2


if __name__ == "__main__":
    key = jax.random.PRNGKey(0)
    B, C, L = 2, 64, 16            # C must be a multiple of 32 (GroupNorm groups)
    keys = jax.random.split(key, 11)

    x = jax.random.normal(keys[0], (B, C, L), dtype=jnp.float32)
    gamma = 1.0 + 0.1 * jax.random.normal(keys[1], (C,), dtype=jnp.float32)
    beta = 0.1 * jax.random.normal(keys[2], (C,), dtype=jnp.float32)

    bound = 1.0 / math.sqrt(C)     # PyTorch Conv1d default init range

    def uni(k, shape):
        return jax.random.uniform(k, shape, minval=-bound, maxval=bound,
                                  dtype=jnp.float32)

    wq, bq = uni(keys[3], (C, C, 1)), uni(keys[4], (C,))
    wk, bk = uni(keys[5], (C, C, 1)), uni(keys[6], (C,))
    wv, bv = uni(keys[7], (C, C, 1)), uni(keys[8], (C,))
    wp, bp = uni(keys[9], (C, C, 1)), uni(keys[10], (C,))

    y = jax.block_until_ready(
        attn_block(x, gamma, beta, wq, bq, wk, bk, wv, bv, wp, bp))

    ref = _attn_block_ref(x, gamma, beta, wq, bq, wk, bk, wv, bv, wp, bp)
    # bf16 MXU path (q/k/v intermediates and weights) -> bf16-level tolerance;
    # softmax statistics and all accumulations stay in f32.
    np.testing.assert_allclose(np.asarray(y), np.asarray(ref),
                               atol=2e-2, rtol=2e-2)
    assert y.shape == (B, C, L)
    print("KERNEL_OK")
</pallas_src>

<mosaic_0001>
module attributes {stable_mosaic.version = 11 : i64} {
  func.func @_gn_stats_kernel(%arg0: i32, %arg1: i32, %arg2: memref<1x16x64xf32, #tpu.memory_space<vmem>>, %arg3: memref<64x64xf32, #tpu.memory_space<vmem>>, %arg4: memref<1x1x64xf32, #tpu.memory_space<vmem>>, %arg5: memref<1x1x64xf32, #tpu.memory_space<vmem>>, %arg6: memref<1x64xf32, #tpu.memory_space<vmem>>, %arg7: memref<1x64xf32, #tpu.memory_space<vmem>>) attributes {dimension_semantics = [#tpu.dimension_semantics<parallel>, #tpu.dimension_semantics<arbitrary>], iteration_bounds = array<i64: 2, 1>, scalar_prefetch = 0 : i64, scratch_operands = 2 : i64, tpu.core_type = #tpu.core_type<tc>, window_params = [{transform_indices = @transform_0, window_bounds = array<i64: 1, 16, 64>}, {pipeline_mode = #tpu.pipeline_mode<synchronous>, transform_indices = @transform_1, window_bounds = array<i64: 64, 64>}, {transform_indices = @transform_2, window_bounds = array<i64: 1, 1, 64>}, {transform_indices = @transform_3, window_bounds = array<i64: 1, 1, 64>}]} {
    %c0_i32 = arith.constant 0 : i32
    %0 = arith.cmpi eq, %arg1, %c0_i32 : i32
    %1 = arith.extui %0 : i1 to i32
    %c0_i32_0 = arith.constant 0 : i32
    %2 = arith.cmpi ne, %1, %c0_i32_0 : i32
    scf.if %2 {
      %cst_14 = arith.constant 0.000000e+00 : f32
      %19 = vector.broadcast %cst_14 : f32 to vector<1x64xf32>
      %c0_15 = arith.constant 0 : index
      %c0_16 = arith.constant 0 : index
      %20 = vector.load %arg6[%c0_15, %c0_16] : memref<1x64xf32, #tpu.memory_space<vmem>>, vector<1x64xf32>
      tpu.vector_store %arg6[%c0_15, %c0_16], %19 {strides = array<i32>} : memref<1x64xf32, #tpu.memory_space<vmem>>, vector<1x64xf32>,
      %cst_17 = arith.constant 0.000000e+00 : f32
      %21 = vector.broadcast %cst_17 : f32 to vector<1x64xf32>
      %c0_18 = arith.constant 0 : index
      %c0_19 = arith.constant 0 : index
      %22 = vector.load %arg7[%c0_18, %c0_19] : memref<1x64xf32, #tpu.memory_space<vmem>>, vector<1x64xf32>
      tpu.vector_store %arg7[%c0_18, %c0_19], %21 {strides = array<i32>} : memref<1x64xf32, #tpu.memory_space<vmem>>, vector<1x64xf32>,
    } else {
    }
    %c0 = arith.constant 0 : index
    %c0_1 = arith.constant 0 : index
    %c0_2 = arith.constant 0 : index
    %3 = vector.load %arg2[%c0, %c0_1, %c0_2] : memref<1x16x64xf32, #tpu.memory_space<vmem>>, vector<1x16x64xf32>
    %4 = vector.shape_cast %3 : vector<1x16x64xf32> to vector<16x64xf32>
    %c0_3 = arith.constant 0 : index
    %c0_4 = arith.constant 0 : index
    %5 = vector.load %arg6[%c0_3, %c0_4] : memref<1x64xf32, #tpu.memory_space<vmem>>, vector<1x64xf32>
    %cst = arith.constant dense<0.000000e+00> : vector<64xf32>
    %6 = vector.multi_reduction <add>, %4, %cst [0] : vector<16x64xf32> to vector<64xf32>
    %7 = vector.shape_cast %6 : vector<64xf32> to vector<1x64xf32>
    %8 = arith.addf %5, %7 : vector<1x64xf32>
    %c0_5 = arith.constant 0 : index
    %c0_6 = arith.constant 0 : index
    %9 = vector.load %arg6[%c0_5, %c0_6] : memref<1x64xf32, #tpu.memory_space<vmem>>, vector<1x64xf32>
    tpu.vector_store %arg6[%c0_5, %c0_6], %8 {strides = array<i32>} : memref<1x64xf32, #tpu.memory_space<vmem>>, vector<1x64xf32>,
    %c0_7 = arith.constant 0 : index
    %c0_8 = arith.constant 0 : index
    %10 = vector.load %arg7[%c0_7, %c0_8] : memref<1x64xf32, #tpu.memory_space<vmem>>, vector<1x64xf32>
    %11 = arith.mulf %4, %4 : vector<16x64xf32>
    %cst_9 = arith.constant dense<0.000000e+00> : vector<64xf32>
    %12 = vector.multi_reduction <add>, %11, %cst_9 [0] : vector<16x64xf32> to vector<64xf32>
    %13 = vector.shape_cast %12 : vector<64xf32> to vector<1x64xf32>
    %14 = arith.addf %10, %13 : vector<1x64xf32>
    %c0_10 = arith.constant 0 : index
    %c0_11 = arith.constant 0 : index
    %15 = vector.load %arg7[%c0_10, %c0_11] : memref<1x64xf32, #tpu.memory_space<vmem>>, vector<1x64xf32>
    tpu.vector_store %arg7[%c0_10, %c0_11], %14 {strides = array<i32>} : memref<1x64xf32, #tpu.memory_space<vmem>>, vector<1x64xf32>,
    %c0_i32_12 = arith.constant 0 : i32
    %16 = arith.cmpi eq, %arg1, %c0_i32_12 : i32
    %17 = arith.extui %16 : i1 to i32
    %c0_i32_13 = arith.constant 0 : i32
    %18 = arith.cmpi ne, %17, %c0_i32_13 : i32
    scf.if %18 {
      %c0_14 = arith.constant 0 : index
      %c0_15 = arith.constant 0 : index
      %19 = vector.load %arg6[%c0_14, %c0_15] : memref<1x64xf32, #tpu.memory_space<vmem>>, vector<1x64xf32>
      %c0_16 = arith.constant 0 : index
      %c0_17 = arith.constant 0 : index
      %20 = vector.load %arg3[%c0_16, %c0_17] : memref<64x64xf32, #tpu.memory_space<vmem>>, vector<64x64xf32>
      %cst_18 = arith.constant dense<0.000000e+00> : vector<1x64xf32>
      %21 = tpu.matmul %19, %20, %cst_18 {dimension_numbers = #tpu.dot_dimension_numbers<[1], [0], [0], [1], [0, 0, 1, 1], [], []>} : vector<1x64xf32>, vector<64x64xf32>, vector<1x64xf32> -> vector<1x64xf32>
      %c0_19 = arith.constant 0 : index
      %c0_20 = arith.constant 0 : index
      %22 = vector.load %arg7[%c0_19, %c0_20] : memref<1x64xf32, #tpu.memory_space<vmem>>, vector<1x64xf32>
      %c0_21 = arith.constant 0 : index
      %c0_22 = arith.constant 0 : index
      %23 = vector.load %arg3[%c0_21, %c0_22] : memref<64x64xf32, #tpu.memory_space<vmem>>, vector<64x64xf32>
      %cst_23 = arith.constant dense<0.000000e+00> : vector<1x64xf32>
      %24 = tpu.matmul %22, %23, %cst_23 {dimension_numbers = #tpu.dot_dimension_numbers<[1], [0], [0], [1], [0, 0, 1, 1], [], []>} : vector<1x64xf32>, vector<64x64xf32>, vector<1x64xf32> -> vector<1x64xf32>
      %25 = arith.mulf %21, %21 : vector<1x64xf32>
      %26 = arith.subf %24, %25 : vector<1x64xf32>
      %c0_24 = arith.constant 0 : index
      %c0_25 = arith.constant 0 : index
      %c0_26 = arith.constant 0 : index
      %27 = vector.load %arg4[%c0_24, %c0_25, %c0_26] : memref<1x1x64xf32, #tpu.memory_space<vmem>>, vector<1x1x64xf32>
      %28 = vector.shape_cast %27 : vector<1x1x64xf32> to vector<1x64xf32>
      %29 = vector.shape_cast %21 : vector<1x64xf32> to vector<1x1x64xf32>
      tpu.vector_store %arg4[%c0_24, %c0_25, %c0_26], %29 {strides = array<i32>} : memref<1x1x64xf32, #tpu.memory_space<vmem>>, vector<1x1x64xf32>,
      %cst_27 = arith.constant 9.99999997E-7 : f32
      %30 = vector.broadcast %cst_27 : f32 to vector<1x64xf32>
      %31 = arith.addf %26, %30 : vector<1x64xf32>
      %32 = math.rsqrt %31 : vector<1x64xf32>
      %c0_28 = arith.constant 0 : index
      %c0_29 = arith.constant 0 : index
      %c0_30 = arith.constant 0 : index
      %33 = vector.load %arg5[%c0_28, %c0_29, %c0_30] : memref<1x1x64xf32, #tpu.memory_space<vmem>>, vector<1x1x64xf32>
      %34 = vector.shape_cast %33 : vector<1x1x64xf32> to vector<1x64xf32>
      %35 = vector.shape_cast %32 : vector<1x64xf32> to vector<1x1x64xf32>
      tpu.vector_store %arg5[%c0_28, %c0_29, %c0_30], %35 {strides = array<i32>} : memref<1x1x64xf32, #tpu.memory_space<vmem>>, vector<1x1x64xf32>,
    } else {
    }
    return
  }
  func.func @transform_0(%arg0: i32, %arg1: i32) -> (i32, i32, i32) {
    %c0_i32 = arith.constant 0 : i32
    %c0_i32_0 = arith.constant 0 : i32
    return %arg0, %arg1, %c0_i32 : i32, i32, i32
  }
  func.func @transform_1(%arg0: i32, %arg1: i32) -> (i32, i32) {
    %c0_i32 = arith.constant 0 : i32
    %c0_i32_0 = arith.constant 0 : i32
    %c0_i32_1 = arith.constant 0 : i32
    return %c0_i32, %c0_i32_0 : i32, i32
  }
  func.func @transform_2(%arg0: i32, %arg1: i32) -> (i32, i32, i32) {
    %c0_i32 = arith.constant 0 : i32
    %c0_i32_0 = arith.constant 0 : i32
    %c0_i32_1 = arith.constant 0 : i32
    return %arg0, %c0_i32, %c0_i32_0 : i32, i32, i32
  }
  func.func @transform_3(%arg0: i32, %arg1: i32) -> (i32, i32, i32) {
    %c0_i32 = arith.constant 0 : i32
    %c0_i32_0 = arith.constant 0 : i32
    %c0_i32_1 = arith.constant 0 : i32
    return %arg0, %c0_i32, %c0_i32_0 : i32, i32, i32
  }
}

</mosaic_0001>

<llo_original>
// kernel: tpu_custom_call.1
$region0: #{tpu_custom_call.1}
  #allocation0 [shape = 'u32[]', space=smem, size = 0x4, offset = 0x4, fixed_abs, tag = 'smem constant byte address 0x4 - core index']
  #allocation1 [shape = 'u32[144,128]{1,0:T(1,128)}', space=vmem, size = 0x12000, scoped, tag = 'internal scratch']
  #allocation2 [shape = 'f32[1,64]{1,0:T(1,128)}', space=vmem, size = 0x200, scoped, tag = 'scratch operand']
  #allocation3 [shape = 'f32[1,64]{1,0:T(1,128)}', space=vmem, size = 0x200, scoped, tag = 'scratch operand']
  %s0 = inlined_call_operand.hbm [shape: f32[2,16,64], index: 0, kind: input, shape index: {}]
  %s1 = inlined_call_operand.hbm [shape: f32[64,64], index: 1, kind: input, shape index: {}]
  %s2 = inlined_call_operand.hbm [shape: f32[2,1,64], index: 2, kind: output, shape index: {0}]
  %s3 = inlined_call_operand.hbm [shape: f32[2,1,64], index: 3, kind: output, shape index: {1}]
  %4 = xla_tuple %s2, %s3
  %s5 = sld [smem:[#allocation0]]
  $region65: #{tpu_custom_call.1} parent=0
    _
  %s7 = ssub.s32 1, %s5
  %s8 = scalar_select 0, %s7, %s5
  $region1: #{tpu_custom_call.1} parent=0
    #allocation4 [shape = 'u8[16384]{0}', space=vmem, size = 0x4000, scoped, tag = 'input window, operand 0']
    #allocation5 [shape = 's32[2]{0}', space=sflag, size = 0x8, scoped, tag = 'scoped memory for tpu_custom_call.1']
    #allocation6 [shape = 's32[2]{0}', space=sflag, size = 0x8, scoped, tag = 'scoped memory for tpu_custom_call.1']
    #allocation7 [shape = 'u8[32768]{0}', space=vmem, size = 0x8000, scoped, tag = 'input window, operand 1, single buffered']
    #allocation8 [shape = 's32[1]{0}', space=sflag, size = 0x4, scoped, tag = 'scoped memory for tpu_custom_call.1']
    #allocation9 [shape = 'u8[1024]{0}', space=vmem, size = 0x400, scoped, tag = 'output window, operand 0']
    #allocation10 [shape = 'u8[1024]{0}', space=vmem, size = 0x400, scoped, tag = 'output window, operand 1']
    #allocation11 [shape = 's32[2]{0}', space=sflag, size = 0x8, scoped, tag = 'scoped memory for tpu_custom_call.1']
    %9 = vsyncpa [#allocation5], 0
    %s10 = scalar_lea.sflag [#allocation5], 1
    %11 = vsyncpa %s10, 0
    %12 = vsyncpa [#allocation8], 0
    %13 = vsyncpa [#allocation6], 0
    %s14 = scalar_lea.sflag [#allocation6], 1
    %15 = vsyncpa %s14, 0
    %16 = vsyncpa [#allocation11], 0
    %s17 = scalar_lea.sflag [#allocation11], 1
    %18 = vsyncpa %s17, 0
    loop: start=0, step=1, limit=4
    $region2: #{tpu_custom_call.1} parent=1 // loop_pre_header
      _
    $region3: #{tpu_custom_call.1} parent=1 // loop_header
      %s20 = sphi 0, %s24
      %p21 = scmp.ge.s32.totalorder %s20, 4
      %s27 = sphi 0, %s39
      %s28 = sphi 0, %s35
      %s29 = sphi 0, %s27
      %s30 = sphi 0, %s28
      %s31 = sphi 0, %s29
      %s32 = sphi 0, %s30
      %s44 = sphi 0, %s46
      %s47 = sphi 0, %s44
      %s48 = sphi 0, %s47
      %s64 = sphi 0, %s48
      %s68 = sphi 0, %s68
      %s70 = sphi 0, %s68
      %s71 = sphi 0, %s70
      %s85 = sphi 0, %s71
      %s91 = sphi 0, %s93
      %s94 = sphi 0, %s91
      %s95 = sphi 0, %s94
      %s111 = sphi 0, %s95
      %s117 = sphi 0, %s119
      %s120 = sphi 0, %s117
      %s121 = sphi 0, %s120
      %s137 = sphi 0, %s121
    $region4: #{tpu_custom_call.1} parent=1 // loop_header_branch
      %23 = sbr.rel (%p21) target = $region8
    $region5: #{tpu_custom_call.1} parent=1 // loop_body
      %s25 = ssub.s32 %s20, 1
      %s26 = ssub.s32 %s20, 2
      %s33 = sadd.s32 1, %s28
      %p34 = scmp.ge.s32.totalorder %s33, 1
      %s35 = scalar_select %p34, 0, %s33
      %s36 = sadd.s32 1, %s27
      %s37 = scalar_select %p34, %s36, %s27
      %p38 = scmp.ge.s32.totalorder %s37, 2
      %s39 = scalar_select %p38, 0, %s37
      %s40 = ssub.s32 %s27, %s39
      %s41 = ssub.s32 %s28, %s35
      %s42 = sor.u32 %s40, %s41
      %p43 = scmp.eq.s32.totalorder %s42, 0
      %s45 = sadd.s32 %s44, 1
      %s46 = scalar_select %p43, %s44, %s45
      %p49 = pneg %p43
      %p50 = scmp.eq.s32.totalorder %s20, 1
      %p51 = por %p49, %p50
      %p52 = scmp.ne.s32.totalorder %s44, %s47
      %p53 = scmp.eq.s32.totalorder %s20, 0
      %p54 = por %p52, %p53
      %p55 = scmp.ne.s32.totalorder %s44, %s47
      %p56 = scmp.eq.s32.totalorder %s25, 1
      %p57 = por %p55, %p56
      %p58 = scmp.ne.s32.totalorder %s47, %s48
      %p59 = scmp.eq.s32.totalorder %s25, 0
      %p60 = por %p58, %p59
      %p61 = scmp.ne.s32.totalorder %s47, %s48
      %p62 = scmp.eq.s32.totalorder %s26, 1
      %p63 = por %p61, %p62
      %p65 = scmp.ne.s32.totalorder %s48, %s64
      %p66 = scmp.eq.s32.totalorder %s26, 0
      %p67 = por %p65, %p66
      %s69 = sadd.s32 %s68, 1
      %p72 = scmp.eq.s32.totalorder %s20, 1
      %p73 = scmp.ne.s32.totalorder %s68, %s70
      %p74 = scmp.eq.s32.totalorder %s20, 0
      %p75 = por %p73, %p74
      %p76 = scmp.ne.s32.totalorder %s68, %s70
      %p77 = scmp.eq.s32.totalorder %s25, 1
      %p78 = por %p76, %p77
      %p79 = scmp.ne.s32.totalorder %s70, %s71
      %p80 = scmp.eq.s32.totalorder %s25, 0
      %p81 = por %p79, %p80
      %p82 = scmp.ne.s32.totalorder %s70, %s71
      %p83 = scmp.eq.s32.totalorder %s26, 1
      %p84 = por %p82, %p83
      %p86 = scmp.ne.s32.totalorder %s71, %s85
      %p87 = scmp.eq.s32.totalorder %s26, 0
      %p88 = por %p86, %p87
      %s89 = ssub.s32 %s27, %s39
      %p90 = scmp.eq.s32.totalorder %s89, 0
      %s92 = sadd.s32 %s91, 1
      %s93 = scalar_select %p90, %s91, %s92
      %p96 = pneg %p90
      %p97 = scmp.eq.s32.totalorder %s20, 1
      %p98 = por %p96, %p97
      %p99 = scmp.ne.s32.totalorder %s91, %s94
      %p100 = scmp.eq.s32.totalorder %s20, 0
      %p101 = por %p99, %p100
      %p102 = scmp.ne.s32.totalorder %s91, %s94
      %p103 = scmp.eq.s32.totalorder %s25, 1
      %p104 = por %p102, %p103
      %p105 = scmp.ne.s32.totalorder %s94, %s95
      %p106 = scmp.eq.s32.totalorder %s25, 0
      %p107 = por %p105, %p106
      %p108 = scmp.ne.s32.totalorder %s94, %s95
      %p109 = scmp.eq.s32.totalorder %s26, 1
      %p110 = por %p108, %p109
      %p112 = scmp.ne.s32.totalorder %s95, %s111
      %p113 = scmp.eq.s32.totalorder %s26, 0
      %p114 = por %p112, %p113
      %s115 = ssub.s32 %s27, %s39
      %p116 = scmp.eq.s32.totalorder %s115, 0
      %s118 = sadd.s32 %s117, 1
      %s119 = scalar_select %p116, %s117, %s118
      %p122 = pneg %p116
      %p123 = scmp.eq.s32.totalorder %s20, 1
      %p124 = por %p122, %p123
      %p125 = scmp.ne.s32.totalorder %s117, %s120
      %p126 = scmp.eq.s32.totalorder %s20, 0
      %p127 = por %p125, %p126
      %p128 = scmp.ne.s32.totalorder %s117, %s120
      %p129 = scmp.eq.s32.totalorder %s25, 1
      %p130 = por %p128, %p129
      %p131 = scmp.ne.s32.totalorder %s120, %s121
      %p132 = scmp.eq.s32.totalorder %s25, 0
      %p133 = por %p131, %p132
      %p134 = scmp.ne.s32.totalorder %s120, %s121
      %p135 = scmp.eq.s32.totalorder %s26, 1
      %p136 = por %p134, %p135
      %p138 = scmp.ne.s32.totalorder %s121, %s137
      %p139 = scmp.eq.s32.totalorder %s26, 0
      %p140 = por %p138, %p139
      %p141 = scmp.le.s32.totalorder 1, %s20
      %p142 = scmp.lt.s32.totalorder %s20, 3
      %p143 = pnand %p141, %p142
      %p144 = pneg %p143
      // Predicated region
      $region9: #{tpu_custom_call.1} parent=5 // pred_check
        _
      $region10: #{tpu_custom_call.1} parent=5 // pred_check_branch
        %146 = sbr.rel (%p143) target = $region12
      $region11: #{tpu_custom_call.1} parent=5 // pred_region
        %s147 = ssub.s32 %s20, 1
        // Predicated region
        $region13: #{tpu_custom_call.1} parent=11 // pred_check
          %p148 = pneg %p81
        $region14: #{tpu_custom_call.1} parent=11 // pred_check_branch
          %150 = sbr.rel (%p148) target = $region16
        $region15: #{tpu_custom_call.1} parent=11 // pred_region
          %s152 = ssub.s32 1024, 1024
          %153 = vsyncadd [#allocation8], %s152
          %s154 = sshll.u32 [#allocation7], 4
          %s155 = int_to_ptr.vmem [resolvable:$true] %s154
          %160 = dma.hbm_to_vmem [thread:$0]  %s1, 1024, %s155, [#allocation8], 128, 128, 8
        $region16: #{tpu_custom_call.1} parent=11 // pred_fallthru
          _
      $region12: #{tpu_custom_call.1} parent=5 // pred_fallthru
        _
      %p161 = scmp.lt.s32.totalorder %s20, 2
      // Predicated region
      $region17: #{tpu_custom_call.1} parent=5 // pred_check
        %p162 = pneg %p161
      $region18: #{tpu_custom_call.1} parent=5 // pred_check_branch
        %164 = sbr.rel (%p162) target = $region20
      $region19: #{tpu_custom_call.1} parent=5 // pred_region
        // Predicated region
        $region21: #{tpu_custom_call.1} parent=19 // pred_check
          %p165 = pneg %p54
        $region22: #{tpu_custom_call.1} parent=19 // pred_check_branch
          %167 = sbr.rel (%p165) target = $region24
        $region23: #{tpu_custom_call.1} parent=19 // pred_region
          %s168 = sand.u32 %s44, 1
          %s169 = scalar_lea.sflag [#allocation5], %s168
          %s170 = sand.u32 %s44, 1
          %s171 = smul.addr %s170, 16
          %s172 = scalar_lea.vmem [#allocation4], %s171
          %s173 = smul.u32 2, %s28
          %s175 = ssub.s32 256, 256
          %176 = vsyncadd %s169, %s175
          %s177 = smul.addr %s27, 2
          %s178 = sadd.s32 %s173, %s177
          %s179 = smul.addr %s178, 128
          %s180 = scalar_lea.hbm %s0, %s179
          %s181 = sshll.u32 %s172, 4
          %s182 = int_to_ptr.vmem [resolvable:$true] %s181
          %187 = dma.hbm_to_vmem [thread:$0]  %s180, 256, %s182, %s169, 128, 128, 8
        $region24: #{tpu_custom_call.1} parent=19 // pred_fallthru
          _
      $region20: #{tpu_custom_call.1} parent=5 // pred_fallthru
        _
      %p188 = scmp.le.s32.totalorder 1, %s20
      %p189 = scmp.lt.s32.totalorder %s20, 3
      %p190 = pnand %p188, %p189
      %p191 = pneg %p190
      // Predicated region
      $region25: #{tpu_custom_call.1} parent=5 // pred_check
        _
      $region26: #{tpu_custom_call.1} parent=5 // pred_check_branch
        %193 = sbr.rel (%p190) target = $region28
      $region27: #{tpu_custom_call.1} parent=5 // pred_region
        %s194 = ssub.s32 %s20, 1
        %s195 = sand.u32 %s47, 1
        %s196 = scalar_lea.sflag [#allocation5], %s195
        %s197 = sand.u32 %s47, 1
        %s198 = smul.addr %s197, 16
        %s199 = scalar_lea.vmem [#allocation4], %s198
        // Predicated region
        $region29: #{tpu_custom_call.1} parent=27 // pred_check
          %p200 = pneg %p60
        $region30: #{tpu_custom_call.1} parent=27 // pred_check_branch
          %202 = sbr.rel (%p200) target = $region32
        $region31: #{tpu_custom_call.1} parent=27 // pred_region
          %203 = dma.done %s196, 256
        $region32: #{tpu_custom_call.1} parent=27 // pred_fallthru
          _
        // Predicated region
        $region33: #{tpu_custom_call.1} parent=27 // pred_check
          %p204 = pneg %p81
        $region34: #{tpu_custom_call.1} parent=27 // pred_check_branch
          %206 = sbr.rel (%p204) target = $region36
        $region35: #{tpu_custom_call.1} parent=27 // pred_region
          %207 = dma.done [#allocation8], 1024
        $region36: #{tpu_custom_call.1} parent=27 // pred_fallthru
          _
        %s208 = sand.u32 %s47, 1
        %s209 = scalar_lea.sflag [#allocation5], %s208
        %s210 = sand.u32 %s47, 1
        %s211 = smul.addr %s210, 16
        %s212 = scalar_lea.vmem [#allocation4], %s211
        %p213 = pneg %p60
        %p214 = pneg %p57
        %p215 = pneg %p81
        %p216 = pneg %p78
        %p217 = pneg %p107
        %p218 = pneg %p104
        %s219 = sand.u32 %s94, 1
        %s220 = scalar_lea.sflag [#allocation6], %s219
        %s221 = sand.u32 %s94, 1
        %s222 = scalar_lea.vmem [#allocation9], %s221
        %p223 = pneg %p133
        %p224 = pneg %p130
        %s225 = sand.u32 %s120, 1
        %s226 = scalar_lea.sflag [#allocation11], %s225
        %s227 = sand.u32 %s120, 1
        %s228 = scalar_lea.vmem [#allocation10], %s227
        %s229 = smul.u32 2, %s30
        %p230 = scmp.eq.s32.totalorder %s30, 0
        // Predicated region
        $region37: #{tpu_custom_call.1} parent=27 // pred_check
          %p231 = pneg %p230
        $region38: #{tpu_custom_call.1} parent=27 // pred_check_branch
          %233 = sbr.rel (%p231) target = $region40
        $region39: #{tpu_custom_call.1} parent=27 // pred_region
          %vm234 = vcmask 516096
          %235 = vst.msk [vmem:[#allocation2] sm:$0x1] %vm234, 0.0
          %236 = vst.msk [vmem:[#allocation3] sm:$0x1] %vm234, 0.0
        $region40: #{tpu_custom_call.1} parent=27 // pred_fallthru
          _
        %v237 = vld [vmem:[%s199] sm:$0xff]
        %v238 = vld [vmem:[%s199 + $0x8] sm:$0xff]
        %v239 = vld [vmem:[#allocation2] sm:$0x1]
        %vm240 = vcmask 523264
        %v241 = vsel %vm240, %v237, 0.0
        %v242 = vsel %vm240, %v238, 0.0
        %v243 = vadd.f32 %v241, %v242
        %v244 = vrot.slane %v243, 4
        %v245 = vadd.f32 %v243, %v244
        %v246 = vrot.slane %v245, 2
        %v247 = vadd.f32 %v245, %v246
        %v248 = vrot.slane %v247, 1
        %v249 = vadd.f32 %v247, %v248
        %v250 = vadd.f32 %v239, %v249
        %vm251 = vcmask 516096
        %252 = vst.msk [vmem:[#allocation2] sm:$0x1] %vm251, %v250
        %v253 = vld [vmem:[#allocation3] sm:$0x1]
        %v254 = vmul.f32 %v237, %v237
        %v255 = vmul.f32 %v238, %v238
        %v256 = vsel %vm240, %v254, 0.0
        %v257 = vsel %vm240, %v255, 0.0
        %v258 = vadd.f32 %v256, %v257
        %v259 = vrot.slane %v258, 4
        %v260 = vadd.f32 %v258, %v259
        %v261 = vrot.slane %v260, 2
        %v262 = vadd.f32 %v260, %v261
        %v263 = vrot.slane %v262, 1
        %v264 = vadd.f32 %v262, %v263
        %v265 = vadd.f32 %v253, %v264
        %266 = vst.msk [vmem:[#allocation3] sm:$0x1] %vm251, %v265
        // Predicated region
        $region41: #{tpu_custom_call.1} parent=27 // pred_check
          %p267 = pneg %p230
        $region42: #{tpu_custom_call.1} parent=27 // pred_check_branch
          %269 = sbr.rel (%p267) target = $region44
        $region43: #{tpu_custom_call.1} parent=27 // pred_region
          %v270 = vld [vmem:[#allocation2] sm:$0x1]
          %v271 = vld [vmem:[#allocation7] sm:$0xff]
          %v272 = vld [vmem:[#allocation7 + $0x8] sm:$0xff]
          %v273 = vld [vmem:[#allocation7 + $0x10] sm:$0xff]
          %v274 = vld [vmem:[#allocation7 + $0x18] sm:$0xff]
          %v275 = vld [vmem:[#allocation7 + $0x20] sm:$0xff]
          %v276 = vld [vmem:[#allocation7 + $0x28] sm:$0xff]
          %v277 = vld [vmem:[#allocation7 + $0x30] sm:$0xff]
          %v278 = vld [vmem:[#allocation7 + $0x38] sm:$0xff]
          %v280 = vsel %vm240, %v270, 0
          %282 = vmatprep.subr.mxu0 0.0
          %283 = vmatpush1.msra.mxu0 %v271
          %284 = vmatprep.subr.mxu0 0.0
          %285 = vmatpush1.msra.mxu0 %v272
          %286 = vmatprep.subr.mxu0 0.0
          %287 = vmatpush1.msra.mxu0 %v273
          %288 = vmatprep.subr.mxu0 0.0
          %289 = vmatpush1.msra.mxu0 %v274
          %290 = vmatprep.subr.mxu0 0.0
          %291 = vmatpush1.msra.mxu0 %v275
          %292 = vmatprep.subr.mxu0 0.0
          %293 = vmatpush1.msra.mxu0 %v276
          %294 = vmatprep.subr.mxu0 0.0
          %295 = vmatpush1.msra.mxu0 %v277
          %296 = vmatprep.subr.mxu0 0.0
          %297 = vmatpush1.msra.mxu0 %v278
          %298 = vmatprep.subr.mxu0 0.0
          %299 = vmatpush1.msra.mxu0 0.0
          %300 = vmatprep.subr.mxu0 0.0
          %301 = vmatpush1.msra.mxu0 0.0
          %302 = vmatprep.subr.mxu0 0.0
          %303 = vmatpush1.msra.mxu0 0.0
          %304 = vmatprep.subr.mxu0 0.0
          %305 = vmatpush1.msra.mxu0 0.0
          %306 = vmatprep.subr.mxu0 0.0
          %307 = vmatpush1.msra.mxu0 0.0
          %308 = vmatprep.subr.mxu0 0.0
          %309 = vmatpush1.msra.mxu0 0.0
          %310 = vmatprep.subr.mxu0 0.0
          %311 = vmatpush1.msra.mxu0 0.0
          %312 = vmatprep.subr.mxu0 0.0
          %313 = vmatpush1.msra.mxu0 0.0
          %314 = vmatprep.subr.mxu0 0.0
          %315 = vmatpush1.msra.mxu0 0.0
          %316 = vmatprep.subr.mxu0 0.0
          %317 = vmatpush1.msra.mxu0 0.0
          %318 = vmatprep.subr.mxu0 0.0
          %319 = vmatpush1.msra.mxu0 0.0
          %320 = vmatprep.subr.mxu0 0.0
          %321 = vmatpush1.msra.mxu0 0.0
          %322 = vmatprep.subr.mxu0 0.0
          %323 = vmatpush1.msra.mxu0 0.0
          %324 = vmatprep.subr.mxu0 0.0
          %325 = vmatpush1.msra.mxu0 0.0
          %326 = vmatprep.subr.mxu0 0.0
          %327 = vmatpush1.msra.mxu0 0.0
          %328 = vmatprep.subr.mxu0 0.0
          %329 = vmatpush1.msra.mxu0 0.0
          %330 = vmatprep.subr.mxu0 0.0
          %331 = vmatpush1.msra.mxu0 0.0
          %332 = vmatprep.subr.mxu0 0.0
          %333 = vmatpush1.msra.mxu0 0.0
          %334 = vmatprep.subr.mxu0 0.0
          %335 = vmatpush1.msra.mxu0 0.0
          %336 = vmatprep.subr.mxu0 0.0
          %337 = vmatpush1.msra.mxu0 0.0
          %338 = vmatprep.subr.mxu0 0.0
          %339 = vmatpush1.msra.mxu0 0.0
          %340 = vmatprep.subr.mxu0 0.0
          %341 = vmatpush1.msra.mxu0 0.0
          %342 = vmatprep.subr.mxu0 0.0
          %343 = vmatpush1.msra.mxu0 0.0
          %344 = vmatprep.subr.mxu0 0.0
          %345 = vmatpush1.msra.mxu0 0.0
          %346 = vmatprep.mubr.f32.mxu0 0.0
          %347 = vmatmul.mubr.f32.gmra.mrb[0].mxu0 %v280
          %v348 = vpop.f32.mrb[0].mxu0
          %v349 = vadd.f32 0.0, %v348
          %v350 = vpop.f32.mrb[0].mxu0
          %351 = vdwg.mxu0
          %v352 = vld [vmem:[#allocation3] sm:$0x1]
          %v354 = vsel %vm240, %v352, 0
          %356 = vmatprep.subr.mxu0 0.0
          %357 = vmatpush1.msra.mxu0 %v271
          %358 = vmatprep.subr.mxu0 0.0
          %359 = vmatpush1.msra.mxu0 %v272
          %360 = vmatprep.subr.mxu0 0.0
          %361 = vmatpush1.msra.mxu0 %v273
          %362 = vmatprep.subr.mxu0 0.0
          %363 = vmatpush1.msra.mxu0 %v274
          %364 = vmatprep.subr.mxu0 0.0
          %365 = vmatpush1.msra.mxu0 %v275
          %366 = vmatprep.subr.mxu0 0.0
          %367 = vmatpush1.msra.mxu0 %v276
          %368 = vmatprep.subr.mxu0 0.0
          %369 = vmatpush1.msra.mxu0 %v277
          %370 = vmatprep.subr.mxu0 0.0
          %371 = vmatpush1.msra.mxu0 %v278
          %372 = vmatprep.subr.mxu0 0.0
          %373 = vmatpush1.msra.mxu0 0.0
          %374 = vmatprep.subr.mxu0 0.0
          %375 = vmatpush1.msra.mxu0 0.0
          %376 = vmatprep.subr.mxu0 0.0
          %377 = vmatpush1.msra.mxu0 0.0
          %378 = vmatprep.subr.mxu0 0.0
          %379 = vmatpush1.msra.mxu0 0.0
          %380 = vmatprep.subr.mxu0 0.0
          %381 = vmatpush1.msra.mxu0 0.0
          %382 = vmatprep.subr.mxu0 0.0
          %383 = vmatpush1.msra.mxu0 0.0
          %384 = vmatprep.subr.mxu0 0.0
          %385 = vmatpush1.msra.mxu0 0.0
          %386 = vmatprep.subr.mxu0 0.0
          %387 = vmatpush1.msra.mxu0 0.0
          %388 = vmatprep.subr.mxu0 0.0
          %389 = vmatpush1.msra.mxu0 0.0
          %390 = vmatprep.subr.mxu0 0.0
          %391 = vmatpush1.msra.mxu0 0.0
          %392 = vmatprep.subr.mxu0 0.0
          %393 = vmatpush1.msra.mxu0 0.0
          %394 = vmatprep.subr.mxu0 0.0
          %395 = vmatpush1.msra.mxu0 0.0
          %396 = vmatprep.subr.mxu0 0.0
          %397 = vmatpush1.msra.mxu0 0.0
          %398 = vmatprep.subr.mxu0 0.0
          %399 = vmatpush1.msra.mxu0 0.0
          %400 = vmatprep.subr.mxu0 0.0
          %401 = vmatpush1.msra.mxu0 0.0
          %402 = vmatprep.subr.mxu0 0.0
          %403 = vmatpush1.msra.mxu0 0.0
          %404 = vmatprep.subr.mxu0 0.0
          %405 = vmatpush1.msra.mxu0 0.0
          %406 = vmatprep.subr.mxu0 0.0
          %407 = vmatpush1.msra.mxu0 0.0
          %408 = vmatprep.subr.mxu0 0.0
          %409 = vmatpush1.msra.mxu0 0.0
          %410 = vmatprep.subr.mxu0 0.0
          %411 = vmatpush1.msra.mxu0 0.0
          %412 = vmatprep.subr.mxu0 0.0
          %413 = vmatpush1.msra.mxu0 0.0
          %414 = vmatprep.subr.mxu0 0.0
          %415 = vmatpush1.msra.mxu0 0.0
          %416 = vmatprep.subr.mxu0 0.0
          %417 = vmatpush1.msra.mxu0 0.0
          %418 = vmatprep.subr.mxu0 0.0
          %419 = vmatpush1.msra.mxu0 0.0
          %420 = vmatprep.mubr.f32.mxu0 0.0
          %421 = vmatmul.mubr.f32.gmra.mrb[0].mxu0 %v354
          %v422 = vpop.f32.mrb[0].mxu0
          %v423 = vadd.f32 0.0, %v422
          %v424 = vpop.f32.mrb[0].mxu0
          %425 = vdwg.mxu0
          %v426 = vmul.f32 %v349, %v349
          %v427 = vsub.f32 %v423, %v426
          %428 = vst.msk [vmem:[%s222] sm:$0x1] %vm251, %v349
          %v429 = vadd.f32 %v427, 1e-06
          %v430 = vrsqrt.pop %v429
          %431 = vst.msk [vmem:[%s228] sm:$0x1] %vm251, %v430
        $region44: #{tpu_custom_call.1} parent=27 // pred_fallthru
          _
        %s432 = sand.u32 %s94, 1
        %s433 = scalar_lea.sflag [#allocation6], %s432
        %s434 = sand.u32 %s94, 1
        %s435 = scalar_lea.vmem [#allocation9], %s434
        %s436 = sand.u32 %s120, 1
        %s437 = scalar_lea.sflag [#allocation11], %s436
        %s438 = sand.u32 %s120, 1
        %s439 = scalar_lea.vmem [#allocation10], %s438
        // Predicated region
        $region45: #{tpu_custom_call.1} parent=27 // pred_check
          %p440 = pneg %p104
        $region46: #{tpu_custom_call.1} parent=27 // pred_check_branch
          %442 = sbr.rel (%p440) target = $region48
        $region47: #{tpu_custom_call.1} parent=27 // pred_region
          %s444 = ssub.s32 16, 16
          %445 = vsyncadd %s433, %s444
          %s446 = smul.addr %s29, 16
          %s447 = scalar_lea.hbm %s2, %s446
          %s449 = sshll.u32 %s435, 4
          %s450 = int_to_ptr.vmem [resolvable:$true] %s449
          %452 = dma.vmem_to_hbm [thread:$0]  %s450, 16, %s447, %s433
        $region48: #{tpu_custom_call.1} parent=27 // pred_fallthru
          _
        // Predicated region
        $region49: #{tpu_custom_call.1} parent=27 // pred_check
          %p453 = pneg %p130
        $region50: #{tpu_custom_call.1} parent=27 // pred_check_branch
          %455 = sbr.rel (%p453) target = $region52
        $region51: #{tpu_custom_call.1} parent=27 // pred_region
          %s457 = ssub.s32 16, 16
          %458 = vsyncadd %s437, %s457
          %s459 = smul.addr %s29, 16
          %s460 = scalar_lea.hbm %s3, %s459
          %s462 = sshll.u32 %s439, 4
          %s463 = int_to_ptr.vmem [resolvable:$true] %s462
          %465 = dma.vmem_to_hbm [thread:$0]  %s463, 16, %s460, %s437
        $region52: #{tpu_custom_call.1} parent=27 // pred_fallthru
          _
      $region28: #{tpu_custom_call.1} parent=5 // pred_fallthru
        _
      %p466 = scmp.le.s32.totalorder 2, %s20
      // Predicated region
      $region53: #{tpu_custom_call.1} parent=5 // pred_check
        %p467 = pneg %p466
      $region54: #{tpu_custom_call.1} parent=5 // pred_check_branch
        %469 = sbr.rel (%p467) target = $region56
      $region55: #{tpu_custom_call.1} parent=5 // pred_region
        %s470 = ssub.s32 %s20, 2
        // Predicated region
        $region57: #{tpu_custom_call.1} parent=55 // pred_check
          %p471 = pneg %p110
        $region58: #{tpu_custom_call.1} parent=55 // pred_check_branch
          %473 = sbr.rel (%p471) target = $region60
        $region59: #{tpu_custom_call.1} parent=55 // pred_region
          %s474 = sand.u32 %s95, 1
          %s475 = scalar_lea.sflag [#allocation6], %s474
          %s476 = sand.u32 %s95, 1
          %s477 = scalar_lea.vmem [#allocation9], %s476
          %478 = dma.done %s475, 16
        $region60: #{tpu_custom_call.1} parent=55 // pred_fallthru
          _
        // Predicated region
        $region61: #{tpu_custom_call.1} parent=55 // pred_check
          %p479 = pneg %p136
        $region62: #{tpu_custom_call.1} parent=55 // pred_check_branch
          %481 = sbr.rel (%p479) target = $region64
        $region63: #{tpu_custom_call.1} parent=55 // pred_region
          %s482 = sand.u32 %s121, 1
          %s483 = scalar_lea.sflag [#allocation11], %s482
          %s484 = sand.u32 %s121, 1
          %s485 = scalar_lea.vmem [#allocation10], %s484
          %486 = dma.done %s483, 16
        $region64: #{tpu_custom_call.1} parent=55 // pred_fallthru
          _
      $region56: #{tpu_custom_call.1} parent=5 // pred_fallthru
        _
    $region6: #{tpu_custom_call.1} parent=1 // loop_footer
      %s24 = sadd.s32 1, %s20
    $region7: #{tpu_custom_call.1} parent=1 // loop_footer_branch
      %19 = sbr.rel target = $region3
    $region8: #{tpu_custom_call.1} parent=1 // loop_exit
      _
    %487 = vsyncpa [#allocation5], 1
    %s488 = scalar_lea.sflag [#allocation5], 1
    %489 = vsyncpa %s488, 1
    %490 = vsyncpa [#allocation8], 1
    %491 = vsyncpa [#allocation6], 1
    %s492 = scalar_lea.sflag [#allocation6], 1
    %493 = vsyncpa %s492, 1
    %494 = vsyncpa [#allocation11], 1
    %s495 = scalar_lea.sflag [#allocation11], 1
    %496 = vsyncpa %s495, 1

</llo_original>
